<compile_context>
chip_gen: v6e
topology: v6e:2x2x1
jax: 0.10.0
libtpu: 0.0.40
codegen_flags: <defaults>
</compile_context>

<pallas_src>
import jax
import jax.numpy as jnp
from jax import lax
from jax.experimental import pallas as pl
from jax.experimental.pallas import tpu as pltpu

LN_EPS = 1e-5
OUT_PAD = 128  # lane-dense padded width for the final (H -> 1) projection


def _round_up(x, m):
    return (x + m - 1) // m * m


def _gelu_exact(x):
    # PyTorch nn.GELU() default: exact erf-based GELU.
    return 0.5 * x * (1.0 + lax.erf(x * (1.0 / jnp.sqrt(2.0))))


def _layernorm(x, gamma, beta):
    mu = jnp.mean(x, axis=-1, keepdims=True)
    var = jnp.mean(jnp.square(x - mu), axis=-1, keepdims=True)
    return (x - mu) * lax.rsqrt(var + LN_EPS) * gamma + beta


def _layernorm_two_halves(x, gamma, beta, left_mask, inv_h):
    """LayerNorm applied independently to the left H lanes and right H lanes of x.

    x: (rows, 2H); left_mask: (1, 2H) bool, True on the first H lanes.  Masked lane
    reductions keep everything in the (rows, 2H) layout (no lane split/concat).
    """
    xl = jnp.where(left_mask, x, 0.0)
    xr = x - xl
    mu = jnp.where(left_mask,
                   jnp.sum(xl, axis=-1, keepdims=True) * inv_h,
                   jnp.sum(xr, axis=-1, keepdims=True) * inv_h)
    d = x - mu
    dl = jnp.where(left_mask, d, 0.0)
    dr = d - dl
    var = jnp.where(left_mask,
                    jnp.sum(dl * dl, axis=-1, keepdims=True) * inv_h,
                    jnp.sum(dr * dr, axis=-1, keepdims=True) * inv_h)
    return d * lax.rsqrt(var + LN_EPS) * gamma + beta


def _make_kernel(H, T, tb):
    two_h = 2 * H
    inv_h = 1.0 / H
    inv_t = 1.0 / T

    def kernel(x_ref,                 # (tb*T, 2F)  [keys | values] row tile
               eW1_ref, eW2_ref,      # block-diagonal fused encoder weights
               evec_ref,              # (4, 2H): [b1; gamma; beta; b2], each [key|value]
               cW1_ref, cvec_ref,     # classifier W1 and (3, H): [b1; gamma; beta]
               cW2p_ref, cb2p_ref,    # lane-dense padded final projection
               out_ref):              # (tb, OUT_PAD)
        # Fused dual-encoder first linear: [k|v] @ blockdiag(kW1, vW1) + [kb1|vb1].
        h = (jnp.dot(x_ref[...], eW1_ref[...], preferred_element_type=jnp.float32)
             + evec_ref[0:1, :])

        # Per-half LayerNorm (left H lanes = key path, right H lanes = value path).
        lane = lax.broadcasted_iota(jnp.int32, (1, two_h), 1)
        left = lane < H
        h = _layernorm_two_halves(h, evec_ref[1:2, :], evec_ref[2:3, :], left, inv_h)
        h = _gelu_exact(h)

        # Token mean hoisted above W2.  T is a multiple of 8, so the reshape is a pure
        # sublane regroup and the reduce runs on the XLU (no pooling matmul).
        m = jnp.sum(h.reshape(tb, T, two_h), axis=1) * inv_t                  # (tb, 2H)

        # Fused second encoder linear on the pooled features: (tb, 2H) = [kf | vf].
        feats = (jnp.dot(m, eW2_ref[...], preferred_element_type=jnp.float32)
                 + evec_ref[3:4, :])

        # Classifier: features are already lane-concatenated -> single GEMM with cW1.
        c = (jnp.dot(feats, cW1_ref[...], preferred_element_type=jnp.float32)
             + cvec_ref[0:1, :])
        c = _layernorm(c, cvec_ref[1:2, :], cvec_ref[2:3, :])
        c = _gelu_exact(c)

        # Lane-dense padded final projection; column 0 carries the real logit.
        out = (jnp.dot(c, cW2p_ref[...], preferred_element_type=jnp.float32)
               + cb2p_ref[...])
        out_ref[...] = out.astype(out_ref.dtype)

    return kernel


def token_discriminator(keys, values, params, *, tb=None):
    """keys/values: (B, T, F) f32.  Returns (B, 1) f32 logits."""
    B, T, F = keys.shape
    H = params["kW1"].shape[1]
    # TODO(synk): non multiple-of-8 num_tokens would need a padded sublane reduce or a
    # pooling-matmul fallback; the module default (32) and this test (8) are fine.
    assert T % 8 == 0, "num_tokens must be a multiple of 8 for the sublane token mean"

    if tb is None:
        Bp8 = _round_up(B, 8)
        # Large row tiles amortize the ~0.35us per-grid-step overhead; keep >=2 grid steps
        # when the batch allows so the "parallel" batch axis can use both v7x TensorCores.
        tb = min(128, max(8, 8 * (Bp8 // 16)))
    assert tb % 8 == 0, "batch tile must be a multiple of 8 (sublane constraint)"

    # Pad batch up to a multiple of the tile.  Zero-padded rows stay finite through
    # LayerNorm (var=0 -> rsqrt(eps) scaled by 0) and are sliced off at the end.
    Bp = _round_up(B, tb)
    if Bp != B:
        pad = Bp - B
        keys = jnp.concatenate([keys, jnp.zeros((pad, T, F), keys.dtype)], axis=0)
        values = jnp.concatenate([values, jnp.zeros((pad, T, F), values.dtype)], axis=0)

    # Lane-concatenate keys|values and flatten to rows (wrapper-side layout plumbing).
    # TODO(synk): on HBM-bandwidth-poor v5e, optionally cast x2 to bf16 here (MXU is
    # full-rate bf16); kept f32 for exact parity with the f32 PyTorch module.
    x2 = jnp.concatenate([keys, values], axis=-1).reshape(Bp * T, 2 * F)

    f32 = jnp.float32
    zFH = jnp.zeros((F, H), f32)
    zHH = jnp.zeros((H, H), f32)
    # Block-diagonal fused encoder weights.
    eW1 = jnp.concatenate(
        [jnp.concatenate([params["kW1"], zFH], axis=1),
         jnp.concatenate([zFH, params["vW1"]], axis=1)], axis=0)            # (2F, 2H)
    eW2 = jnp.concatenate(
        [jnp.concatenate([params["kW2"], zHH], axis=1),
         jnp.concatenate([zHH, params["vW2"]], axis=1)], axis=0)            # (2H, 2H)
    # Packed encoder slab (4, 2H): rows = [b1; gamma; beta; b2], each [key-half | value-half].
    evec = jnp.concatenate([
        jnp.concatenate([params["kb1"], params["vb1"]], axis=1),
        jnp.concatenate([params["kg"], params["vg"]], axis=1),
        jnp.concatenate([params["kbt"], params["vbt"]], axis=1),
        jnp.concatenate([params["kb2"], params["vb2"]], axis=1)], axis=0)
    # Packed classifier slab (3, H): rows = [b1; gamma; beta].
    cvec = jnp.concatenate([params["cb1"], params["cg"], params["cbt"]], axis=0)
    cW1 = params["cW1"]
    # Lane-dense padded final projection (column 0 carries the real logit).
    cW2p = jnp.zeros((H, OUT_PAD), f32).at[:, 0].set(params["cW2"][:, 0])
    cb2p = jnp.zeros((1, OUT_PAD), f32).at[0, 0].set(params["cb2"][0, 0])

    args = (x2, eW1, eW2, evec, cW1, cvec, cW2p, cb2p)

    grid = (Bp // tb,)
    row_spec = pl.BlockSpec((tb * T, 2 * F), lambda i: (i, 0))        # streamed per tile
    const_spec = lambda a: pl.BlockSpec(a.shape, lambda i: (0, 0))    # resident constants
    in_specs = [row_spec] + [const_spec(a) for a in args[1:]]
    out_spec = pl.BlockSpec((tb, OUT_PAD), lambda i: (i, 0))

    # Advisory cost estimate for XLA's surrounding scheduler (kept in sync with the kernel).
    flops = int(
        2 * Bp * T * (2 * F) * (2 * H)     # fused encoder W1 (block-diagonal GEMM)
        + Bp * T * 2 * H                   # token-mean sublane reduce
        + 2 * Bp * (2 * H) * (2 * H)       # fused encoder W2 (post-mean)
        + 2 * Bp * (2 * H) * H             # classifier W1
        + 2 * Bp * H * OUT_PAD             # padded final projection
    )
    transcendentals = int(Bp * T * 2 * H + Bp * H)                    # erf calls
    bytes_accessed = int(
        x2.size * 4 + sum(int(a.size) for a in args[1:]) * 4 + Bp * OUT_PAD * 4)

    out = pl.pallas_call(
        _make_kernel(H, T, tb),
        out_shape=jax.ShapeDtypeStruct((Bp, OUT_PAD), jnp.float32),
        grid=grid,
        in_specs=in_specs,
        out_specs=out_spec,
        compiler_params=pltpu.CompilerParams(
            dimension_semantics=("parallel",),
            vmem_limit_bytes=48 * 1024 * 1024),
        cost_estimate=pl.CostEstimate(
            flops=flops, transcendentals=transcendentals, bytes_accessed=bytes_accessed),
    )(*args)
    return out[:B, :1]


def reference_forward(keys, values, p):
    def encoder(x, W1, b1, g, bt, W2, b2):
        h = x @ W1 + b1
        h = _layernorm(h, g, bt)
        h = _gelu_exact(h)
        h = h @ W2 + b2
        return jnp.mean(h, axis=1)

    kf = encoder(keys, p["kW1"], p["kb1"], p["kg"], p["kbt"], p["kW2"], p["kb2"])
    vf = encoder(values, p["vW1"], p["vb1"], p["vg"], p["vbt"], p["vW2"], p["vb2"])
    comb = jnp.concatenate([kf, vf], axis=-1)
    h = comb @ p["cW1"] + p["cb1"]
    h = _layernorm(h, p["cg"], p["cbt"])
    h = _gelu_exact(h)
    return h @ p["cW2"] + p["cb2"]


def init_params(key, in_features, hidden_dim):
    ks = jax.random.split(key, 12)
    f32 = jnp.float32

    def w(k, shape, scale=0.05):
        return (scale * jax.random.normal(k, shape)).astype(f32)

    H = hidden_dim
    return {
        # key encoder
        "kW1": w(ks[0], (in_features, H)), "kb1": w(ks[1], (1, H)),
        "kg": jnp.ones((1, H), f32), "kbt": jnp.zeros((1, H), f32),
        "kW2": w(ks[2], (H, H)), "kb2": w(ks[3], (1, H)),
        # value encoder
        "vW1": w(ks[4], (in_features, H)), "vb1": w(ks[5], (1, H)),
        "vg": jnp.ones((1, H), f32), "vbt": jnp.zeros((1, H), f32),
        "vW2": w(ks[6], (H, H)), "vb2": w(ks[7], (1, H)),
        # classifier
        "cW1": w(ks[8], (2 * H, H)), "cb1": w(ks[9], (1, H)),
        "cg": jnp.ones((1, H), f32), "cbt": jnp.zeros((1, H), f32),
        "cW2": w(ks[10], (H, 1)), "cb2": w(ks[11], (1, 1)),
    }


if __name__ == "__main__":
    T, F, H = 8, 32, 32   # num_tokens, in_features, hidden_dim

    root = jax.random.PRNGKey(0)
    k_keys, k_vals, k_params = jax.random.split(root, 3)
    params = init_params(k_params, F, H)

    B = 16
    keys = jax.random.normal(k_keys, (B, T, F), dtype=jnp.float32)
    values = jax.random.normal(k_vals, (B, T, F), dtype=jnp.float32)

    # Case 1: default tile heuristic -> tb=8, 2 grid steps (pipelining + v7x both-core path).
    out = jax.block_until_ready(token_discriminator(keys, values, params))
    ref = jax.block_until_ready(reference_forward(keys, values, params))
    assert out.shape == (B, 1), out.shape
    assert jnp.allclose(out, ref, atol=1e-5, rtol=1e-5), (out, ref)

    # Case 2: small batch not divisible by the tile -> padding path, single step.
    B2 = 2
    out2 = jax.block_until_ready(token_discriminator(keys[:B2], values[:B2], params))
    ref2 = jax.block_until_ready(reference_forward(keys[:B2], values[:B2], params))
    assert out2.shape == (B2, 1), out2.shape
    assert jnp.allclose(out2, ref2, atol=1e-5, rtol=1e-5), (out2, ref2)

    # Case 3: explicit large tile (tb=64) with batch padding -> big-tile path.
    B3 = 10
    out3 = jax.block_until_ready(token_discriminator(keys[:B3], values[:B3], params, tb=64))
    ref3 = jax.block_until_ready(reference_forward(keys[:B3], values[:B3], params))
    assert out3.shape == (B3, 1), out3.shape
    assert jnp.allclose(out3, ref3, atol=1e-5, rtol=1e-5), (out3, ref3)

    print("KERNEL_OK")
</pallas_src>

<mosaic_0001>
module attributes {stable_mosaic.version = 11 : i64} {
  func.func @kernel(%arg0: i32, %arg1: memref<64x64xf32, #tpu.memory_space<vmem>>, %arg2: memref<64x64xf32, #tpu.memory_space<vmem>>, %arg3: memref<64x64xf32, #tpu.memory_space<vmem>>, %arg4: memref<4x64xf32, #tpu.memory_space<vmem>>, %arg5: memref<64x32xf32, #tpu.memory_space<vmem>>, %arg6: memref<3x32xf32, #tpu.memory_space<vmem>>, %arg7: memref<32x128xf32, #tpu.memory_space<vmem>>, %arg8: memref<1x128xf32, #tpu.memory_space<vmem>>, %arg9: memref<8x128xf32, #tpu.memory_space<vmem>>) attributes {dimension_semantics = [#tpu.dimension_semantics<parallel>], iteration_bounds = array<i64: 2>, scalar_prefetch = 0 : i64, scratch_operands = 0 : i64, tpu.core_type = #tpu.core_type<tc>, window_params = [{transform_indices = @transform_0, window_bounds = array<i64: 64, 64>}, {pipeline_mode = #tpu.pipeline_mode<synchronous>, transform_indices = @transform_1, window_bounds = array<i64: 64, 64>}, {pipeline_mode = #tpu.pipeline_mode<synchronous>, transform_indices = @transform_2, window_bounds = array<i64: 64, 64>}, {pipeline_mode = #tpu.pipeline_mode<synchronous>, transform_indices = @transform_3, window_bounds = array<i64: 4, 64>}, {pipeline_mode = #tpu.pipeline_mode<synchronous>, transform_indices = @transform_4, window_bounds = array<i64: 64, 32>}, {pipeline_mode = #tpu.pipeline_mode<synchronous>, transform_indices = @transform_5, window_bounds = array<i64: 3, 32>}, {pipeline_mode = #tpu.pipeline_mode<synchronous>, transform_indices = @transform_6, window_bounds = array<i64: 32, 128>}, {pipeline_mode = #tpu.pipeline_mode<synchronous>, transform_indices = @transform_7, window_bounds = array<i64: 1, 128>}, {transform_indices = @transform_8, window_bounds = array<i64: 8, 128>}]} {
    %c0 = arith.constant 0 : index
    %c0_0 = arith.constant 0 : index
    %0 = vector.load %arg1[%c0, %c0_0] : memref<64x64xf32, #tpu.memory_space<vmem>>, vector<64x64xf32>
    %c0_1 = arith.constant 0 : index
    %c0_2 = arith.constant 0 : index
    %1 = vector.load %arg2[%c0_1, %c0_2] : memref<64x64xf32, #tpu.memory_space<vmem>>, vector<64x64xf32>
    %cst = arith.constant dense<0.000000e+00> : vector<64x64xf32>
    %2 = tpu.matmul %0, %1, %cst {dimension_numbers = #tpu.dot_dimension_numbers<[1], [0], [0], [1], [0, 0, 1, 1], [], []>} : vector<64x64xf32>, vector<64x64xf32>, vector<64x64xf32> -> vector<64x64xf32>
    %c0_3 = arith.constant 0 : index
    %c0_4 = arith.constant 0 : index
    %3 = vector.load %arg4[%c0_3, %c0_4] : memref<4x64xf32, #tpu.memory_space<vmem>>, vector<1x64xf32>
    %4 = vector.broadcast %3 : vector<1x64xf32> to vector<64x64xf32>
    %5 = arith.addf %2, %4 : vector<64x64xf32>
    %6 = tpu.iota {dimensions = array<i32: 1>} : vector<1x64xi32>
    %c32_i32 = arith.constant 32 : i32
    %7 = vector.broadcast %c32_i32 : i32 to vector<1x64xi32>
    %8 = arith.cmpi slt, %6, %7 : vector<1x64xi32>
    %c1 = arith.constant 1 : index
    %c0_5 = arith.constant 0 : index
    %9 = vector.load %arg4[%c1, %c0_5] : memref<4x64xf32, #tpu.memory_space<vmem>>, vector<1x64xf32>
    %c2 = arith.constant 2 : index
    %c0_6 = arith.constant 0 : index
    %10 = vector.load %arg4[%c2, %c0_6] : memref<4x64xf32, #tpu.memory_space<vmem>>, vector<1x64xf32>
    %cst_7 = arith.constant 0.000000e+00 : f32
    %11 = vector.shape_cast %8 : vector<1x64xi1> to vector<1x64xi1>
    %12 = vector.broadcast %11 : vector<1x64xi1> to vector<64x64xi1>
    %13 = vector.broadcast %cst_7 : f32 to vector<64x64xf32>
    %14 = arith.select %12, %5, %13 : vector<64x64xi1>, vector<64x64xf32>
    %15 = arith.subf %5, %14 : vector<64x64xf32>
    %cst_8 = arith.constant dense<0.000000e+00> : vector<64xf32>
    %16 = vector.multi_reduction <add>, %14, %cst_8 [1] : vector<64x64xf32> to vector<64xf32>
    %17 = vector.shape_cast %16 : vector<64xf32> to vector<64x1xf32>
    %cst_9 = arith.constant 3.125000e-02 : f32
    %18 = vector.broadcast %cst_9 : f32 to vector<64x1xf32>
    %19 = arith.mulf %17, %18 : vector<64x1xf32>
    %cst_10 = arith.constant dense<0.000000e+00> : vector<64xf32>
    %20 = vector.multi_reduction <add>, %15, %cst_10 [1] : vector<64x64xf32> to vector<64xf32>
    %21 = vector.shape_cast %20 : vector<64xf32> to vector<64x1xf32>
    %cst_11 = arith.constant 3.125000e-02 : f32
    %22 = vector.broadcast %cst_11 : f32 to vector<64x1xf32>
    %23 = arith.mulf %21, %22 : vector<64x1xf32>
    %24 = vector.shape_cast %8 : vector<1x64xi1> to vector<1x64xi1>
    %25 = vector.broadcast %24 : vector<1x64xi1> to vector<64x64xi1>
    %26 = vector.shape_cast %19 : vector<64x1xf32> to vector<64x1xf32>
    %27 = vector.broadcast %26 : vector<64x1xf32> to vector<64x64xf32>
    %28 = vector.shape_cast %23 : vector<64x1xf32> to vector<64x1xf32>
    %29 = vector.broadcast %28 : vector<64x1xf32> to vector<64x64xf32>
    %30 = arith.select %25, %27, %29 : vector<64x64xi1>, vector<64x64xf32>
    %31 = arith.subf %5, %30 : vector<64x64xf32>
    %cst_12 = arith.constant 0.000000e+00 : f32
    %32 = vector.shape_cast %8 : vector<1x64xi1> to vector<1x64xi1>
    %33 = vector.broadcast %32 : vector<1x64xi1> to vector<64x64xi1>
    %34 = vector.broadcast %cst_12 : f32 to vector<64x64xf32>
    %35 = arith.select %33, %31, %34 : vector<64x64xi1>, vector<64x64xf32>
    %36 = arith.subf %31, %35 : vector<64x64xf32>
    %37 = arith.mulf %35, %35 : vector<64x64xf32>
    %cst_13 = arith.constant dense<0.000000e+00> : vector<64xf32>
    %38 = vector.multi_reduction <add>, %37, %cst_13 [1] : vector<64x64xf32> to vector<64xf32>
    %39 = vector.shape_cast %38 : vector<64xf32> to vector<64x1xf32>
    %cst_14 = arith.constant 3.125000e-02 : f32
    %40 = vector.broadcast %cst_14 : f32 to vector<64x1xf32>
    %41 = arith.mulf %39, %40 : vector<64x1xf32>
    %42 = arith.mulf %36, %36 : vector<64x64xf32>
    %cst_15 = arith.constant dense<0.000000e+00> : vector<64xf32>
    %43 = vector.multi_reduction <add>, %42, %cst_15 [1] : vector<64x64xf32> to vector<64xf32>
    %44 = vector.shape_cast %43 : vector<64xf32> to vector<64x1xf32>
    %cst_16 = arith.constant 3.125000e-02 : f32
    %45 = vector.broadcast %cst_16 : f32 to vector<64x1xf32>
    %46 = arith.mulf %44, %45 : vector<64x1xf32>
    %47 = vector.shape_cast %8 : vector<1x64xi1> to vector<1x64xi1>
    %48 = vector.broadcast %47 : vector<1x64xi1> to vector<64x64xi1>
    %49 = vector.shape_cast %41 : vector<64x1xf32> to vector<64x1xf32>
    %50 = vector.broadcast %49 : vector<64x1xf32> to vector<64x64xf32>
    %51 = vector.shape_cast %46 : vector<64x1xf32> to vector<64x1xf32>
    %52 = vector.broadcast %51 : vector<64x1xf32> to vector<64x64xf32>
    %53 = arith.select %48, %50, %52 : vector<64x64xi1>, vector<64x64xf32>
    %cst_17 = arith.constant 9.99999974E-6 : f32
    %54 = vector.broadcast %cst_17 : f32 to vector<64x64xf32>
    %55 = arith.addf %53, %54 : vector<64x64xf32>
    %56 = math.rsqrt %55 : vector<64x64xf32>
    %57 = arith.mulf %31, %56 : vector<64x64xf32>
    %58 = vector.broadcast %9 : vector<1x64xf32> to vector<64x64xf32>
    %59 = arith.mulf %57, %58 : vector<64x64xf32>
    %60 = vector.broadcast %10 : vector<1x64xf32> to vector<64x64xf32>
    %61 = arith.addf %59, %60 : vector<64x64xf32>
    %cst_18 = arith.constant 5.000000e-01 : f32
    %62 = vector.broadcast %cst_18 : f32 to vector<64x64xf32>
    %63 = arith.mulf %62, %61 : vector<64x64xf32>
    %cst_19 = arith.constant 2.000000e+00 : f32
    %64 = math.sqrt %cst_19 : f32
    %cst_20 = arith.constant 1.000000e+00 : f32
    %65 = arith.divf %cst_20, %64 : f32
    %66 = vector.broadcast %65 : f32 to vector<64x64xf32>
    %67 = arith.mulf %61, %66 : vector<64x64xf32>
    %68 = math.erf %67 : vector<64x64xf32>
    %cst_21 = arith.constant 1.000000e+00 : f32
    %69 = vector.broadcast %cst_21 : f32 to vector<64x64xf32>
    %70 = arith.addf %69, %68 : vector<64x64xf32>
    %71 = arith.mulf %63, %70 : vector<64x64xf32>
    %72 = vector.shape_cast %71 : vector<64x64xf32> to vector<8x8x64xf32>
    %cst_22 = arith.constant dense<0.000000e+00> : vector<8x64xf32>
    %73 = vector.multi_reduction <add>, %72, %cst_22 [1] : vector<8x8x64xf32> to vector<8x64xf32>
    %cst_23 = arith.constant 1.250000e-01 : f32
    %74 = vector.broadcast %cst_23 : f32 to vector<8x64xf32>
    %75 = arith.mulf %73, %74 : vector<8x64xf32>
    %c0_24 = arith.constant 0 : index
    %c0_25 = arith.constant 0 : index
    %76 = vector.load %arg3[%c0_24, %c0_25] : memref<64x64xf32, #tpu.memory_space<vmem>>, vector<64x64xf32>
    %cst_26 = arith.constant dense<0.000000e+00> : vector<8x64xf32>
    %77 = tpu.matmul %75, %76, %cst_26 {dimension_numbers = #tpu.dot_dimension_numbers<[1], [0], [0], [1], [0, 0, 1, 1], [], []>} : vector<8x64xf32>, vector<64x64xf32>, vector<8x64xf32> -> vector<8x64xf32>
    %c3 = arith.constant 3 : index
    %c0_27 = arith.constant 0 : index
    %78 = vector.load %arg4[%c3, %c0_27] : memref<4x64xf32, #tpu.memory_space<vmem>>, vector<1x64xf32>
    %79 = vector.broadcast %78 : vector<1x64xf32> to vector<8x64xf32>
    %80 = arith.addf %77, %79 : vector<8x64xf32>
    %c0_28 = arith.constant 0 : index
    %c0_29 = arith.constant 0 : index
    %81 = vector.load %arg5[%c0_28, %c0_29] : memref<64x32xf32, #tpu.memory_space<vmem>>, vector<64x32xf32>
    %cst_30 = arith.constant dense<0.000000e+00> : vector<8x32xf32>
    %82 = tpu.matmul %80, %81, %cst_30 {dimension_numbers = #tpu.dot_dimension_numbers<[1], [0], [0], [1], [0, 0, 1, 1], [], []>} : vector<8x64xf32>, vector<64x32xf32>, vector<8x32xf32> -> vector<8x32xf32>
    %c0_31 = arith.constant 0 : index
    %c0_32 = arith.constant 0 : index
    %83 = vector.load %arg6[%c0_31, %c0_32] : memref<3x32xf32, #tpu.memory_space<vmem>>, vector<1x32xf32>
    %84 = vector.broadcast %83 : vector<1x32xf32> to vector<8x32xf32>
    %85 = arith.addf %82, %84 : vector<8x32xf32>
    %c1_33 = arith.constant 1 : index
    %c0_34 = arith.constant 0 : index
    %86 = vector.load %arg6[%c1_33, %c0_34] : memref<3x32xf32, #tpu.memory_space<vmem>>, vector<1x32xf32>
    %c2_35 = arith.constant 2 : index
    %c0_36 = arith.constant 0 : index
    %87 = vector.load %arg6[%c2_35, %c0_36] : memref<3x32xf32, #tpu.memory_space<vmem>>, vector<1x32xf32>
    %cst_37 = arith.constant dense<0.000000e+00> : vector<8xf32>
    %88 = vector.multi_reduction <add>, %85, %cst_37 [1] : vector<8x32xf32> to vector<8xf32>
    %89 = vector.shape_cast %88 : vector<8xf32> to vector<8x1xf32>
    %cst_38 = arith.constant 3.200000e+01 : f32
    %90 = vector.broadcast %cst_38 : f32 to vector<8x1xf32>
    %91 = arith.divf %89, %90 : vector<8x1xf32>
    %92 = vector.broadcast %91 : vector<8x1xf32> to vector<8x32xf32>
    %93 = arith.subf %85, %92 : vector<8x32xf32>
    %94 = arith.mulf %93, %93 : vector<8x32xf32>
    %cst_39 = arith.constant dense<0.000000e+00> : vector<8xf32>
    %95 = vector.multi_reduction <add>, %94, %cst_39 [1] : vector<8x32xf32> to vector<8xf32>
    %96 = vector.shape_cast %95 : vector<8xf32> to vector<8x1xf32>
    %cst_40 = arith.constant 3.200000e+01 : f32
    %97 = vector.broadcast %cst_40 : f32 to vector<8x1xf32>
    %98 = arith.divf %96, %97 : vector<8x1xf32>
    %99 = vector.broadcast %91 : vector<8x1xf32> to vector<8x32xf32>
    %100 = arith.subf %85, %99 : vector<8x32xf32>
    %cst_41 = arith.constant 9.99999974E-6 : f32
    %101 = vector.broadcast %cst_41 : f32 to vector<8x1xf32>
    %102 = arith.addf %98, %101 : vector<8x1xf32>
    %103 = math.rsqrt %102 : vector<8x1xf32>
    %104 = vector.broadcast %103 : vector<8x1xf32> to vector<8x32xf32>
    %105 = arith.mulf %100, %104 : vector<8x32xf32>
    %106 = vector.broadcast %86 : vector<1x32xf32> to vector<8x32xf32>
    %107 = arith.mulf %105, %106 : vector<8x32xf32>
    %108 = vector.broadcast %87 : vector<1x32xf32> to vector<8x32xf32>
    %109 = arith.addf %107, %108 : vector<8x32xf32>
    %cst_42 = arith.constant 5.000000e-01 : f32
    %110 = vector.broadcast %cst_42 : f32 to vector<8x32xf32>
    %111 = arith.mulf %110, %109 : vector<8x32xf32>
    %cst_43 = arith.constant 2.000000e+00 : f32
    %112 = math.sqrt %cst_43 : f32
    %cst_44 = arith.constant 1.000000e+00 : f32
    %113 = arith.divf %cst_44, %112 : f32
    %114 = vector.broadcast %113 : f32 to vector<8x32xf32>
    %115 = arith.mulf %109, %114 : vector<8x32xf32>
    %116 = math.erf %115 : vector<8x32xf32>
    %cst_45 = arith.constant 1.000000e+00 : f32
    %117 = vector.broadcast %cst_45 : f32 to vector<8x32xf32>
    %118 = arith.addf %117, %116 : vector<8x32xf32>
    %119 = arith.mulf %111, %118 : vector<8x32xf32>
    %c0_46 = arith.constant 0 : index
    %c0_47 = arith.constant 0 : index
    %120 = vector.load %arg7[%c0_46, %c0_47] : memref<32x128xf32, #tpu.memory_space<vmem>>, vector<32x128xf32>
    %cst_48 = arith.constant dense<0.000000e+00> : vector<8x128xf32>
    %121 = tpu.matmul %119, %120, %cst_48 {dimension_numbers = #tpu.dot_dimension_numbers<[1], [0], [0], [1], [0, 0, 1, 1], [], []>} : vector<8x32xf32>, vector<32x128xf32>, vector<8x128xf32> -> vector<8x128xf32>
    %c0_49 = arith.constant 0 : index
    %c0_50 = arith.constant 0 : index
    %122 = vector.load %arg8[%c0_49, %c0_50] : memref<1x128xf32, #tpu.memory_space<vmem>>, vector<1x128xf32>
    %123 = vector.broadcast %122 : vector<1x128xf32> to vector<8x128xf32>
    %124 = arith.addf %121, %123 : vector<8x128xf32>
    %c0_51 = arith.constant 0 : index
    %c0_52 = arith.constant 0 : index
    %125 = vector.load %arg9[%c0_51, %c0_52] : memref<8x128xf32, #tpu.memory_space<vmem>>, vector<8x128xf32>
    tpu.vector_store %arg9[%c0_51, %c0_52], %124 {strides = array<i32>} : memref<8x128xf32, #tpu.memory_space<vmem>>, vector<8x128xf32>,
    return
  }
  func.func @transform_0(%arg0: i32) -> (i32, i32) {
    %c0_i32 = arith.constant 0 : i32
    %c0_i32_0 = arith.constant 0 : i32
    return %arg0, %c0_i32 : i32, i32
  }
  func.func @transform_1(%arg0: i32) -> (i32, i32) {
    %c0_i32 = arith.constant 0 : i32
    %c0_i32_0 = arith.constant 0 : i32
    %c0_i32_1 = arith.constant 0 : i32
    return %c0_i32, %c0_i32_0 : i32, i32
  }
  func.func @transform_2(%arg0: i32) -> (i32, i32) {
    %c0_i32 = arith.constant 0 : i32
    %c0_i32_0 = arith.constant 0 : i32
    %c0_i32_1 = arith.constant 0 : i32
    return %c0_i32, %c0_i32_0 : i32, i32
  }
  func.func @transform_3(%arg0: i32) -> (i32, i32) {
    %c0_i32 = arith.constant 0 : i32
    %c0_i32_0 = arith.constant 0 : i32
    %c0_i32_1 = arith.constant 0 : i32
    return %c0_i32, %c0_i32_0 : i32, i32
  }
  func.func @transform_4(%arg0: i32) -> (i32, i32) {
    %c0_i32 = arith.constant 0 : i32
    %c0_i32_0 = arith.constant 0 : i32
    %c0_i32_1 = arith.constant 0 : i32
    return %c0_i32, %c0_i32_0 : i32, i32
  }
  func.func @transform_5(%arg0: i32) -> (i32, i32) {
    %c0_i32 = arith.constant 0 : i32
    %c0_i32_0 = arith.constant 0 : i32
    %c0_i32_1 = arith.constant 0 : i32
    return %c0_i32, %c0_i32_0 : i32, i32
  }
  func.func @transform_6(%arg0: i32) -> (i32, i32) {
    %c0_i32 = arith.constant 0 : i32
    %c0_i32_0 = arith.constant 0 : i32
    %c0_i32_1 = arith.constant 0 : i32
    return %c0_i32, %c0_i32_0 : i32, i32
  }
  func.func @transform_7(%arg0: i32) -> (i32, i32) {
    %c0_i32 = arith.constant 0 : i32
    %c0_i32_0 = arith.constant 0 : i32
    %c0_i32_1 = arith.constant 0 : i32
    return %c0_i32, %c0_i32_0 : i32, i32
  }
  func.func @transform_8(%arg0: i32) -> (i32, i32) {
    %c0_i32 = arith.constant 0 : i32
    %c0_i32_0 = arith.constant 0 : i32
    return %arg0, %c0_i32 : i32, i32
  }
}

</mosaic_0001>

<llo_original>
// kernel: tpu_custom_call.1
$region0: #{tpu_custom_call.1}
  #allocation0 [shape = 'u32[]', space=smem, size = 0x4, offset = 0x4, fixed_abs, tag = 'smem constant byte address 0x4 - core index']
  #allocation1 [shape = 'u32[144,128]{1,0:T(1,128)}', space=vmem, size = 0x12000, scoped, tag = 'internal scratch']
  %s0 = inlined_call_operand.vmem [shape: f32[128,64], index: 0, kind: input, shape index: {}]
  %s1 = inlined_call_operand.vmem [shape: f32[64,64], index: 1, kind: input, shape index: {}]
  %s2 = inlined_call_operand.vmem [shape: f32[64,64], index: 2, kind: input, shape index: {}]
  %s3 = inlined_call_operand.vmem [shape: f32[4,64], index: 3, kind: input, shape index: {}]
  %s4 = inlined_call_operand.vmem [shape: f32[64,32], index: 4, kind: input, shape index: {}]
  %s5 = inlined_call_operand.vmem [shape: f32[3,32], index: 5, kind: input, shape index: {}]
  %s6 = inlined_call_operand.vmem [shape: f32[32,128], index: 6, kind: input, shape index: {}]
  %s7 = inlined_call_operand.vmem [shape: f32[1,128], index: 7, kind: input, shape index: {}]
  %s8 = inlined_call_operand.hbm [shape: f32[16,128], index: 8, kind: output, shape index: {}]
  %s9 = sld [smem:[#allocation0]]
  $region65: #{tpu_custom_call.1} parent=0
    _
  %s11 = ssub.s32 1, %s9
  %s12 = scalar_select 0, %s11, %s9
  $region1: #{tpu_custom_call.1} parent=0
    #allocation2 [shape = 'u8[8192]{0}', space=vmem, size = 0x2000, scoped, tag = 'output window, operand 0']
    #allocation3 [shape = 's32[2]{0}', space=sflag, size = 0x8, scoped, tag = 'scoped memory for tpu_custom_call.1']
    %13 = vsyncpa [#allocation3], 0
    %s14 = scalar_lea.sflag [#allocation3], 1
    %15 = vsyncpa %s14, 0
    loop: start=0, step=1, limit=4
    $region2: #{tpu_custom_call.1} parent=1 // loop_pre_header
      _
    $region3: #{tpu_custom_call.1} parent=1 // loop_header
      %s17 = sphi 0, %s21
      %p18 = scmp.ge.s32.totalorder %s17, 4
      %s27 = sphi 0, %s29
      %s30 = sphi 0, %s27
      %s31 = sphi 0, %s30
      %s47 = sphi 0, %s31
      %s51 = sphi 0, %s51
      %s53 = sphi 0, %s51
      %s54 = sphi 0, %s53
      %s68 = sphi 0, %s54
      %s72 = sphi 0, %s72
      %s74 = sphi 0, %s72
      %s75 = sphi 0, %s74
      %s89 = sphi 0, %s75
      %s93 = sphi 0, %s93
      %s95 = sphi 0, %s93
      %s96 = sphi 0, %s95
      %s110 = sphi 0, %s96
      %s114 = sphi 0, %s114
      %s116 = sphi 0, %s114
      %s117 = sphi 0, %s116
      %s131 = sphi 0, %s117
      %s135 = sphi 0, %s135
      %s137 = sphi 0, %s135
      %s138 = sphi 0, %s137
      %s152 = sphi 0, %s138
      %s156 = sphi 0, %s156
      %s158 = sphi 0, %s156
      %s159 = sphi 0, %s158
      %s173 = sphi 0, %s159
      %s177 = sphi 0, %s177
      %s179 = sphi 0, %s177
      %s180 = sphi 0, %s179
      %s194 = sphi 0, %s180
      %s200 = sphi 0, %s202
      %s203 = sphi 0, %s200
      %s204 = sphi 0, %s203
      %s220 = sphi 0, %s204
    $region4: #{tpu_custom_call.1} parent=1 // loop_header_branch
      %20 = sbr.rel (%p18) target = $region8
    $region5: #{tpu_custom_call.1} parent=1 // loop_body
      %s22 = ssub.s32 %s17, 1
      %s23 = ssub.s32 %s17, 2
      %s24 = sadd.s32 %s17, 1
      %s25 = ssub.s32 %s17, %s24
      %p26 = scmp.eq.s32.totalorder %s25, 0
      %s28 = sadd.s32 %s27, 1
      %s29 = scalar_select %p26, %s27, %s28
      %p32 = pneg %p26
      %p33 = scmp.eq.s32.totalorder %s17, 1
      %p34 = por %p32, %p33
      %p35 = scmp.ne.s32.totalorder %s27, %s30
      %p36 = scmp.eq.s32.totalorder %s17, 0
      %p37 = por %p35, %p36
      %p38 = scmp.ne.s32.totalorder %s27, %s30
      %p39 = scmp.eq.s32.totalorder %s22, 1
      %p40 = por %p38, %p39
      %p41 = scmp.ne.s32.totalorder %s30, %s31
      %p42 = scmp.eq.s32.totalorder %s22, 0
      %p43 = por %p41, %p42
      %p44 = scmp.ne.s32.totalorder %s30, %s31
      %p45 = scmp.eq.s32.totalorder %s23, 1
      %p46 = por %p44, %p45
      %p48 = scmp.ne.s32.totalorder %s31, %s47
      %p49 = scmp.eq.s32.totalorder %s23, 0
      %p50 = por %p48, %p49
      %s52 = sadd.s32 %s51, 1
      %p55 = scmp.eq.s32.totalorder %s17, 1
      %p56 = scmp.ne.s32.totalorder %s51, %s53
      %p57 = scmp.eq.s32.totalorder %s17, 0
      %p58 = por %p56, %p57
      %p59 = scmp.ne.s32.totalorder %s51, %s53
      %p60 = scmp.eq.s32.totalorder %s22, 1
      %p61 = por %p59, %p60
      %p62 = scmp.ne.s32.totalorder %s53, %s54
      %p63 = scmp.eq.s32.totalorder %s22, 0
      %p64 = por %p62, %p63
      %p65 = scmp.ne.s32.totalorder %s53, %s54
      %p66 = scmp.eq.s32.totalorder %s23, 1
      %p67 = por %p65, %p66
      %p69 = scmp.ne.s32.totalorder %s54, %s68
      %p70 = scmp.eq.s32.totalorder %s23, 0
      %p71 = por %p69, %p70
      %s73 = sadd.s32 %s72, 1
      %p76 = scmp.eq.s32.totalorder %s17, 1
      %p77 = scmp.ne.s32.totalorder %s72, %s74
      %p78 = scmp.eq.s32.totalorder %s17, 0
      %p79 = por %p77, %p78
      %p80 = scmp.ne.s32.totalorder %s72, %s74
      %p81 = scmp.eq.s32.totalorder %s22, 1
      %p82 = por %p80, %p81
      %p83 = scmp.ne.s32.totalorder %s74, %s75
      %p84 = scmp.eq.s32.totalorder %s22, 0
      %p85 = por %p83, %p84
      %p86 = scmp.ne.s32.totalorder %s74, %s75
      %p87 = scmp.eq.s32.totalorder %s23, 1
      %p88 = por %p86, %p87
      %p90 = scmp.ne.s32.totalorder %s75, %s89
      %p91 = scmp.eq.s32.totalorder %s23, 0
      %p92 = por %p90, %p91
      %s94 = sadd.s32 %s93, 1
      %p97 = scmp.eq.s32.totalorder %s17, 1
      %p98 = scmp.ne.s32.totalorder %s93, %s95
      %p99 = scmp.eq.s32.totalorder %s17, 0
      %p100 = por %p98, %p99
      %p101 = scmp.ne.s32.totalorder %s93, %s95
      %p102 = scmp.eq.s32.totalorder %s22, 1
      %p103 = por %p101, %p102
      %p104 = scmp.ne.s32.totalorder %s95, %s96
      %p105 = scmp.eq.s32.totalorder %s22, 0
      %p106 = por %p104, %p105
      %p107 = scmp.ne.s32.totalorder %s95, %s96
      %p108 = scmp.eq.s32.totalorder %s23, 1
      %p109 = por %p107, %p108
      %p111 = scmp.ne.s32.totalorder %s96, %s110
      %p112 = scmp.eq.s32.totalorder %s23, 0
      %p113 = por %p111, %p112
      %s115 = sadd.s32 %s114, 1
      %p118 = scmp.eq.s32.totalorder %s17, 1
      %p119 = scmp.ne.s32.totalorder %s114, %s116
      %p120 = scmp.eq.s32.totalorder %s17, 0
      %p121 = por %p119, %p120
      %p122 = scmp.ne.s32.totalorder %s114, %s116
      %p123 = scmp.eq.s32.totalorder %s22, 1
      %p124 = por %p122, %p123
      %p125 = scmp.ne.s32.totalorder %s116, %s117
      %p126 = scmp.eq.s32.totalorder %s22, 0
      %p127 = por %p125, %p126
      %p128 = scmp.ne.s32.totalorder %s116, %s117
      %p129 = scmp.eq.s32.totalorder %s23, 1
      %p130 = por %p128, %p129
      %p132 = scmp.ne.s32.totalorder %s117, %s131
      %p133 = scmp.eq.s32.totalorder %s23, 0
      %p134 = por %p132, %p133
      %s136 = sadd.s32 %s135, 1
      %p139 = scmp.eq.s32.totalorder %s17, 1
      %p140 = scmp.ne.s32.totalorder %s135, %s137
      %p141 = scmp.eq.s32.totalorder %s17, 0
      %p142 = por %p140, %p141
      %p143 = scmp.ne.s32.totalorder %s135, %s137
      %p144 = scmp.eq.s32.totalorder %s22, 1
      %p145 = por %p143, %p144
      %p146 = scmp.ne.s32.totalorder %s137, %s138
      %p147 = scmp.eq.s32.totalorder %s22, 0
      %p148 = por %p146, %p147
      %p149 = scmp.ne.s32.totalorder %s137, %s138
      %p150 = scmp.eq.s32.totalorder %s23, 1
      %p151 = por %p149, %p150
      %p153 = scmp.ne.s32.totalorder %s138, %s152
      %p154 = scmp.eq.s32.totalorder %s23, 0
      %p155 = por %p153, %p154
      %s157 = sadd.s32 %s156, 1
      %p160 = scmp.eq.s32.totalorder %s17, 1
      %p161 = scmp.ne.s32.totalorder %s156, %s158
      %p162 = scmp.eq.s32.totalorder %s17, 0
      %p163 = por %p161, %p162
      %p164 = scmp.ne.s32.totalorder %s156, %s158
      %p165 = scmp.eq.s32.totalorder %s22, 1
      %p166 = por %p164, %p165
      %p167 = scmp.ne.s32.totalorder %s158, %s159
      %p168 = scmp.eq.s32.totalorder %s22, 0
      %p169 = por %p167, %p168
      %p170 = scmp.ne.s32.totalorder %s158, %s159
      %p171 = scmp.eq.s32.totalorder %s23, 1
      %p172 = por %p170, %p171
      %p174 = scmp.ne.s32.totalorder %s159, %s173
      %p175 = scmp.eq.s32.totalorder %s23, 0
      %p176 = por %p174, %p175
      %s178 = sadd.s32 %s177, 1
      %p181 = scmp.eq.s32.totalorder %s17, 1
      %p182 = scmp.ne.s32.totalorder %s177, %s179
      %p183 = scmp.eq.s32.totalorder %s17, 0
      %p184 = por %p182, %p183
      %p185 = scmp.ne.s32.totalorder %s177, %s179
      %p186 = scmp.eq.s32.totalorder %s22, 1
      %p187 = por %p185, %p186
      %p188 = scmp.ne.s32.totalorder %s179, %s180
      %p189 = scmp.eq.s32.totalorder %s22, 0
      %p190 = por %p188, %p189
      %p191 = scmp.ne.s32.totalorder %s179, %s180
      %p192 = scmp.eq.s32.totalorder %s23, 1
      %p193 = por %p191, %p192
      %p195 = scmp.ne.s32.totalorder %s180, %s194
      %p196 = scmp.eq.s32.totalorder %s23, 0
      %p197 = por %p195, %p196
      %s198 = ssub.s32 %s17, %s24
      %p199 = scmp.eq.s32.totalorder %s198, 0
      %s201 = sadd.s32 %s200, 1
      %s202 = scalar_select %p199, %s200, %s201
      %p205 = pneg %p199
      %p206 = scmp.eq.s32.totalorder %s17, 1
      %p207 = por %p205, %p206
      %p208 = scmp.ne.s32.totalorder %s200, %s203
      %p209 = scmp.eq.s32.totalorder %s17, 0
      %p210 = por %p208, %p209
      %p211 = scmp.ne.s32.totalorder %s200, %s203
      %p212 = scmp.eq.s32.totalorder %s22, 1
      %p213 = por %p211, %p212
      %p214 = scmp.ne.s32.totalorder %s203, %s204
      %p215 = scmp.eq.s32.totalorder %s22, 0
      %p216 = por %p214, %p215
      %p217 = scmp.ne.s32.totalorder %s203, %s204
      %p218 = scmp.eq.s32.totalorder %s23, 1
      %p219 = por %p217, %p218
      %p221 = scmp.ne.s32.totalorder %s204, %s220
      %p222 = scmp.eq.s32.totalorder %s23, 0
      %p223 = por %p221, %p222
      %p224 = scmp.le.s32.totalorder 1, %s17
      %p225 = scmp.lt.s32.totalorder %s17, 3
      %p226 = pnand %p224, %p225
      %p227 = pneg %p226
      // Predicated region
      $region9: #{tpu_custom_call.1} parent=5 // pred_check
        _
      $region10: #{tpu_custom_call.1} parent=5 // pred_check_branch
        %229 = sbr.rel (%p226) target = $region12
      $region11: #{tpu_custom_call.1} parent=5 // pred_region
        %s230 = ssub.s32 %s17, 1
        // Predicated region
        $region13: #{tpu_custom_call.1} parent=11 // pred_check
          %p231 = pneg %p64
        $region14: #{tpu_custom_call.1} parent=11 // pred_check_branch
          %233 = sbr.rel (%p231) target = $region16
        $region15: #{tpu_custom_call.1} parent=11 // pred_region
          _
        $region16: #{tpu_custom_call.1} parent=11 // pred_fallthru
          _
        // Predicated region
        $region17: #{tpu_custom_call.1} parent=11 // pred_check
          %p234 = pneg %p85
        $region18: #{tpu_custom_call.1} parent=11 // pred_check_branch
          %236 = sbr.rel (%p234) target = $region20
        $region19: #{tpu_custom_call.1} parent=11 // pred_region
          _
        $region20: #{tpu_custom_call.1} parent=11 // pred_fallthru
          _
        // Predicated region
        $region21: #{tpu_custom_call.1} parent=11 // pred_check
          %p237 = pneg %p106
        $region22: #{tpu_custom_call.1} parent=11 // pred_check_branch
          %239 = sbr.rel (%p237) target = $region24
        $region23: #{tpu_custom_call.1} parent=11 // pred_region
          _
        $region24: #{tpu_custom_call.1} parent=11 // pred_fallthru
          _
        // Predicated region
        $region25: #{tpu_custom_call.1} parent=11 // pred_check
          %p240 = pneg %p127
        $region26: #{tpu_custom_call.1} parent=11 // pred_check_branch
          %242 = sbr.rel (%p240) target = $region28
        $region27: #{tpu_custom_call.1} parent=11 // pred_region
          _
        $region28: #{tpu_custom_call.1} parent=11 // pred_fallthru
          _
        // Predicated region
        $region29: #{tpu_custom_call.1} parent=11 // pred_check
          %p243 = pneg %p148
        $region30: #{tpu_custom_call.1} parent=11 // pred_check_branch
          %245 = sbr.rel (%p243) target = $region32
        $region31: #{tpu_custom_call.1} parent=11 // pred_region
          _
        $region32: #{tpu_custom_call.1} parent=11 // pred_fallthru
          _
        // Predicated region
        $region33: #{tpu_custom_call.1} parent=11 // pred_check
          %p246 = pneg %p169
        $region34: #{tpu_custom_call.1} parent=11 // pred_check_branch
          %248 = sbr.rel (%p246) target = $region36
        $region35: #{tpu_custom_call.1} parent=11 // pred_region
          _
        $region36: #{tpu_custom_call.1} parent=11 // pred_fallthru
          _
        // Predicated region
        $region37: #{tpu_custom_call.1} parent=11 // pred_check
          %p249 = pneg %p190
        $region38: #{tpu_custom_call.1} parent=11 // pred_check_branch
          %251 = sbr.rel (%p249) target = $region40
        $region39: #{tpu_custom_call.1} parent=11 // pred_region
          _
        $region40: #{tpu_custom_call.1} parent=11 // pred_fallthru
          _
      $region12: #{tpu_custom_call.1} parent=5 // pred_fallthru
        _
      %p252 = scmp.lt.s32.totalorder %s17, 2
      // Predicated region
      $region41: #{tpu_custom_call.1} parent=5 // pred_check
        %p253 = pneg %p252
      $region42: #{tpu_custom_call.1} parent=5 // pred_check_branch
        %255 = sbr.rel (%p253) target = $region44
      $region43: #{tpu_custom_call.1} parent=5 // pred_region
        // Predicated region
        $region45: #{tpu_custom_call.1} parent=43 // pred_check
          %p256 = pneg %p37
        $region46: #{tpu_custom_call.1} parent=43 // pred_check_branch
          %258 = sbr.rel (%p256) target = $region48
        $region47: #{tpu_custom_call.1} parent=43 // pred_region
          %s259 = smul.u32 8, %s17
          %p260 = scmp.lt.s32.totalorder %s259, 15
          %s261 = scalar_select %p260, %s259, 15
          %s262 = smul.addr %s261, 8
          %s263 = scalar_lea.vmem %s0, %s262
          %s264 = smul.u32 8, %s17
        $region48: #{tpu_custom_call.1} parent=43 // pred_fallthru
          _
      $region44: #{tpu_custom_call.1} parent=5 // pred_fallthru
        _
      %p265 = scmp.le.s32.totalorder 1, %s17
      %p266 = scmp.lt.s32.totalorder %s17, 3
      %p267 = pnand %p265, %p266
      %p268 = pneg %p267
      // Predicated region
      $region49: #{tpu_custom_call.1} parent=5 // pred_check
        _
      $region50: #{tpu_custom_call.1} parent=5 // pred_check_branch
        %270 = sbr.rel (%p267) target = $region52
      $region51: #{tpu_custom_call.1} parent=5 // pred_region
        %s271 = ssub.s32 %s17, 1
        %s272 = smul.u32 8, %s22
        %p273 = scmp.lt.s32.totalorder %s272, 15
        %s274 = scalar_select %p273, %s272, 15
        %s275 = smul.addr %s274, 8
        %s276 = scalar_lea.vmem %s0, %s275
        %p277 = pneg %p43
        %p278 = pneg %p40
        %p279 = pneg %p64
        %p280 = pneg %p61
        %p281 = pneg %p85
        %p282 = pneg %p82
        %p283 = pneg %p106
        %p284 = pneg %p103
        %p285 = pneg %p127
        %p286 = pneg %p124
        %p287 = pneg %p148
        %p288 = pneg %p145
        %p289 = pneg %p169
        %p290 = pneg %p166
        %p291 = pneg %p190
        %p292 = pneg %p187
        %p293 = pneg %p216
        %p294 = pneg %p213
        %s295 = sand.u32 %s203, 1
        %s296 = scalar_lea.sflag [#allocation3], %s295
        %s297 = sand.u32 %s203, 1
        %s298 = smul.addr %s297, 8
        %s299 = scalar_lea.vmem [#allocation2], %s298
        %s300 = smul.u32 8, %s22
        %p301 = scmp.lt.s32.totalorder %s300, 15
        %s302 = scalar_select %p301, %s300, 15
        %s303 = smul.addr %s302, 8
        %s304 = scalar_lea.vmem %s0, %s303
        %s305 = smul.u32 8, %s22
        %v306 = vld [vmem:[%s304] sm:$0xff]
        %v307 = vld [vmem:[%s304 + $0x8] sm:$0xff]
        %v308 = vld [vmem:[%s304 + $0x10] sm:$0xff]
        %v309 = vld [vmem:[%s304 + $0x18] sm:$0xff]
        %v310 = vld [vmem:[%s304 + $0x20] sm:$0xff]
        %v311 = vld [vmem:[%s304 + $0x28] sm:$0xff]
        %v312 = vld [vmem:[%s304 + $0x30] sm:$0xff]
        %v313 = vld [vmem:[%s304 + $0x38] sm:$0xff]
        %v314 = vld [vmem:[%s1] sm:$0xff]
        %v315 = vld [vmem:[%s1 + $0x8] sm:$0xff]
        %v316 = vld [vmem:[%s1 + $0x10] sm:$0xff]
        %v317 = vld [vmem:[%s1 + $0x18] sm:$0xff]
        %v318 = vld [vmem:[%s1 + $0x20] sm:$0xff]
        %v319 = vld [vmem:[%s1 + $0x28] sm:$0xff]
        %v320 = vld [vmem:[%s1 + $0x30] sm:$0xff]
        %v321 = vld [vmem:[%s1 + $0x38] sm:$0xff]
        %v322 = vld [vmem:[%s3] sm:$0x1]
        %v323 = vlaneseq
        %v324 = vshrl.u32 %v323, 7
        %v325 = vsub.s32 0, %v324
        %v326 = vrot.slane %v322, %v325
        %vm327 = vcmask 523264
        %v329 = vsel %vm327, %v306, 0
        %v332 = vsel %vm327, %v307, 0
        %v335 = vsel %vm327, %v308, 0
        %v338 = vsel %vm327, %v309, 0
        %v341 = vsel %vm327, %v310, 0
        %v344 = vsel %vm327, %v311, 0
        %v347 = vsel %vm327, %v312, 0
        %v350 = vsel %vm327, %v313, 0
        %352 = vmatprep.subr.mxu0 0.0
        %353 = vmatpush1.msra.mxu0 0.0
        %354 = vmatprep.subr.mxu0 0.0
        %355 = vmatpush1.msra.mxu0 0.0
        %356 = vmatprep.subr.mxu0 0.0
        %357 = vmatpush1.msra.mxu0 0.0
        %358 = vmatprep.subr.mxu0 0.0
        %359 = vmatpush1.msra.mxu0 0.0
        %360 = vmatprep.subr.mxu0 0.0
        %361 = vmatpush1.msra.mxu0 0.0
        %362 = vmatprep.subr.mxu0 0.0
        %363 = vmatpush1.msra.mxu0 0.0
        %364 = vmatprep.subr.mxu0 0.0
        %365 = vmatpush1.msra.mxu0 0.0
        %366 = vmatprep.subr.mxu0 0.0
        %367 = vmatpush1.msra.mxu0 0.0
        %368 = vmatprep.subr.mxu0 0.0
        %369 = vmatpush1.msra.mxu0 %v321
        %370 = vmatprep.subr.mxu0 0.0
        %371 = vmatpush1.msra.mxu0 %v320
        %372 = vmatprep.subr.mxu0 0.0
        %373 = vmatpush1.msra.mxu0 %v319
        %374 = vmatprep.subr.mxu0 0.0
        %375 = vmatpush1.msra.mxu0 %v318
        %376 = vmatprep.subr.mxu0 0.0
        %377 = vmatpush1.msra.mxu0 %v317
        %378 = vmatprep.subr.mxu0 0.0
        %379 = vmatpush1.msra.mxu0 %v316
        %380 = vmatprep.subr.mxu0 0.0
        %381 = vmatpush1.msra.mxu0 %v315
        %382 = vmatprep.subr.mxu0 0.0
        %383 = vmatpush1.msra.mxu0 %v314
        %384 = vmatprep.subr.mxu0 0.0
        %385 = vmatpush2.msra.mxu0 0.0
        %386 = vmatprep.subr.mxu0 0.0
        %387 = vmatpush2.msra.mxu0 0.0
        %388 = vmatprep.subr.mxu0 0.0
        %389 = vmatpush2.msra.mxu0 0.0
        %390 = vmatprep.subr.mxu0 0.0
        %391 = vmatpush2.msra.mxu0 0.0
        %392 = vmatprep.subr.mxu0 0.0
        %393 = vmatpush2.msra.mxu0 0.0
        %394 = vmatprep.subr.mxu0 0.0
        %395 = vmatpush2.msra.mxu0 0.0
        %396 = vmatprep.subr.mxu0 0.0
        %397 = vmatpush2.msra.mxu0 0.0
        %398 = vmatprep.subr.mxu0 0.0
        %399 = vmatpush2.msra.mxu0 0.0
        %400 = vmatprep.subr.mxu0 0.0
        %401 = vmatpush2.msra.mxu0 0.0
        %402 = vmatprep.subr.mxu0 0.0
        %403 = vmatpush2.msra.mxu0 0.0
        %404 = vmatprep.subr.mxu0 0.0
        %405 = vmatpush2.msra.mxu0 0.0
        %406 = vmatprep.subr.mxu0 0.0
        %407 = vmatpush2.msra.mxu0 0.0
        %408 = vmatprep.subr.mxu0 0.0
        %409 = vmatpush2.msra.mxu0 0.0
        %410 = vmatprep.subr.mxu0 0.0
        %411 = vmatpush2.msra.mxu0 0.0
        %412 = vmatprep.subr.mxu0 0.0
        %413 = vmatpush2.msra.mxu0 0.0
        %414 = vmatprep.subr.mxu0 0.0
        %415 = vmatpush2.msra.mxu0 0.0
        %416 = vmatprep.mubr.f32.mxu0 0.0
        %417 = vmatmul.mubr.f32.gmra.mxu0 %v329
        %v418 = vpop.f32.mrf.mxu0
        %v419 = vadd.f32 %v326, %v418
        %v420 = vpop.f32.mrf.mxu0
        %421 = vmatprep.mubr.f32.mxu0 0.0
        %422 = vmatmul.mubr.f32.gmra.mxu0 %v332
        %v423 = vpop.f32.mrf.mxu0
        %v424 = vadd.f32 %v326, %v423
        %v425 = vpop.f32.mrf.mxu0
        %426 = vmatprep.mubr.f32.mxu0 0.0
        %427 = vmatmul.mubr.f32.gmra.mxu0 %v335
        %v428 = vpop.f32.mrf.mxu0
        %v429 = vadd.f32 %v326, %v428
        %v430 = vpop.f32.mrf.mxu0
        %431 = vmatprep.mubr.f32.mxu0 0.0
        %432 = vmatmul.mubr.f32.gmra.mxu0 %v338
        %v433 = vpop.f32.mrf.mxu0
        %v434 = vadd.f32 %v326, %v433
        %v435 = vpop.f32.mrf.mxu0
        %436 = vmatprep.mubr.f32.mxu0 0.0
        %437 = vmatmul.mubr.f32.gmra.mxu0 %v341
        %v438 = vpop.f32.mrf.mxu0
        %v439 = vadd.f32 %v326, %v438
        %v440 = vpop.f32.mrf.mxu0
        %441 = vmatprep.mubr.f32.mxu0 0.0
        %442 = vmatmul.mubr.f32.gmra.mxu0 %v344
        %v443 = vpop.f32.mrf.mxu0
        %v444 = vadd.f32 %v326, %v443
        %v445 = vpop.f32.mrf.mxu0
        %446 = vmatprep.mubr.f32.mxu0 0.0
        %447 = vmatmul.mubr.f32.gmra.mxu0 %v347
        %v448 = vpop.f32.mrf.mxu0
        %v449 = vadd.f32 %v326, %v448
        %v450 = vpop.f32.mrf.mxu0
        %451 = vmatprep.mubr.f32.mxu0 0.0
        %452 = vmatmul.mubr.f32.gmra.mxu0 %v350
        %v453 = vpop.f32.mrf.mxu0
        %v454 = vadd.f32 %v326, %v453
        %v455 = vpop.f32.mrf.mxu0
        %456 = vdwg.mxu0
        %v457 = vlaneseq
        %v458 = vand.u32 %v457, 127
        %vm459 = vcmp.lt.s32.totalorder %v458, 32
        %v460 = vld [vmem:[%s3 + $0x1] sm:$0x1]
        %v461 = vld [vmem:[%s3 + $0x2] sm:$0x1]
        %v462 = vsel %vm459, 1, 0
        %vm463 = vcmp.eq.s32.totalorder %v462, 1
        %v464 = vsel %vm463, %v419, 0.0
        %v465 = vsel %vm463, %v424, 0.0
        %v466 = vsel %vm463, %v429, 0.0
        %v467 = vsel %vm463, %v434, 0.0
        %v468 = vsel %vm463, %v439, 0.0
        %v469 = vsel %vm463, %v444, 0.0
        %v470 = vsel %vm463, %v449, 0.0
        %v471 = vsel %vm463, %v454, 0.0
        %v472 = vsub.f32 %v419, %v464
        %v473 = vsub.f32 %v424, %v465
        %v474 = vsub.f32 %v429, %v466
        %v475 = vsub.f32 %v434, %v467
        %v476 = vsub.f32 %v439, %v468
        %v477 = vsub.f32 %v444, %v469
        %v478 = vsub.f32 %v449, %v470
        %v479 = vsub.f32 %v454, %v471
        %v480 = vsel %vm327, %v464, 0.0
        %481 = vadd.xlane.f32.xlu0 %v480
        %v482 = vpop.xlane.xlu0 %481
        %v483 = vsel %vm327, %v465, 0.0
        %484 = vadd.xlane.f32.xlu0 %v483
        %v485 = vpop.xlane.xlu0 %484
        %v486 = vsel %vm327, %v466, 0.0
        %487 = vadd.xlane.f32.xlu0 %v486
        %v488 = vpop.xlane.xlu0 %487
        %v489 = vsel %vm327, %v467, 0.0
        %490 = vadd.xlane.f32.xlu0 %v489
        %v491 = vpop.xlane.xlu0 %490
        %v492 = vsel %vm327, %v468, 0.0
        %493 = vadd.xlane.f32.xlu0 %v492
        %v494 = vpop.xlane.xlu0 %493
        %v495 = vsel %vm327, %v469, 0.0
        %496 = vadd.xlane.f32.xlu0 %v495
        %v497 = vpop.xlane.xlu0 %496
        %v498 = vsel %vm327, %v470, 0.0
        %499 = vadd.xlane.f32.xlu0 %v498
        %v500 = vpop.xlane.xlu0 %499
        %v501 = vsel %vm327, %v471, 0.0
        %502 = vadd.xlane.f32.xlu0 %v501
        %v503 = vpop.xlane.xlu0 %502
        %v504 = vmul.f32 %v482, 0.03125
        %v505 = vmul.f32 %v485, 0.03125
        %v506 = vmul.f32 %v488, 0.03125
        %v507 = vmul.f32 %v491, 0.03125
        %v508 = vmul.f32 %v494, 0.03125
        %v509 = vmul.f32 %v497, 0.03125
        %v510 = vmul.f32 %v500, 0.03125
        %v511 = vmul.f32 %v503, 0.03125
        %v512 = vsel %vm327, %v472, 0.0
        %513 = vadd.xlane.f32.xlu0 %v512
        %v514 = vpop.xlane.xlu0 %513
        %v515 = vsel %vm327, %v473, 0.0
        %516 = vadd.xlane.f32.xlu0 %v515
        %v517 = vpop.xlane.xlu0 %516
        %v518 = vsel %vm327, %v474, 0.0
        %519 = vadd.xlane.f32.xlu0 %v518
        %v520 = vpop.xlane.xlu0 %519
        %v521 = vsel %vm327, %v475, 0.0
        %522 = vadd.xlane.f32.xlu0 %v521
        %v523 = vpop.xlane.xlu0 %522
        %v524 = vsel %vm327, %v476, 0.0
        %525 = vadd.xlane.f32.xlu0 %v524
        %v526 = vpop.xlane.xlu0 %525
        %v527 = vsel %vm327, %v477, 0.0
        %528 = vadd.xlane.f32.xlu0 %v527
        %v529 = vpop.xlane.xlu0 %528
        %v530 = vsel %vm327, %v478, 0.0
        %531 = vadd.xlane.f32.xlu0 %v530
        %v532 = vpop.xlane.xlu0 %531
        %v533 = vsel %vm327, %v479, 0.0
        %534 = vadd.xlane.f32.xlu0 %v533
        %v535 = vpop.xlane.xlu0 %534
        %v536 = vmul.f32 %v514, 0.03125
        %v537 = vmul.f32 %v517, 0.03125
        %v538 = vmul.f32 %v520, 0.03125
        %v539 = vmul.f32 %v523, 0.03125
        %v540 = vmul.f32 %v526, 0.03125
        %v541 = vmul.f32 %v529, 0.03125
        %v542 = vmul.f32 %v532, 0.03125
        %v543 = vmul.f32 %v535, 0.03125
        %v544 = vsel %vm463, %v504, %v536
        %v545 = vsel %vm463, %v505, %v537
        %v546 = vsel %vm463, %v506, %v538
        %v547 = vsel %vm463, %v507, %v539
        %v548 = vsel %vm463, %v508, %v540
        %v549 = vsel %vm463, %v509, %v541
        %v550 = vsel %vm463, %v510, %v542
        %v551 = vsel %vm463, %v511, %v543
        %v552 = vsub.f32 %v419, %v544
        %v553 = vsub.f32 %v424, %v545
        %v554 = vsub.f32 %v429, %v546
        %v555 = vsub.f32 %v434, %v547
        %v556 = vsub.f32 %v439, %v548
        %v557 = vsub.f32 %v444, %v549
        %v558 = vsub.f32 %v449, %v550
        %v559 = vsub.f32 %v454, %v551
        %v560 = vsel %vm463, %v552, 0.0
        %v561 = vsel %vm463, %v553, 0.0
        %v562 = vsel %vm463, %v554, 0.0
        %v563 = vsel %vm463, %v555, 0.0
        %v564 = vsel %vm463, %v556, 0.0
        %v565 = vsel %vm463, %v557, 0.0
        %v566 = vsel %vm463, %v558, 0.0
        %v567 = vsel %vm463, %v559, 0.0
        %v568 = vsub.f32 %v552, %v560
        %v569 = vsub.f32 %v553, %v561
        %v570 = vsub.f32 %v554, %v562
        %v571 = vsub.f32 %v555, %v563
        %v572 = vsub.f32 %v556, %v564
        %v573 = vsub.f32 %v557, %v565
        %v574 = vsub.f32 %v558, %v566
        %v575 = vsub.f32 %v559, %v567
        %v576 = vmul.f32 %v560, %v560
        %v577 = vmul.f32 %v561, %v561
        %v578 = vmul.f32 %v562, %v562
        %v579 = vmul.f32 %v563, %v563
        %v580 = vmul.f32 %v564, %v564
        %v581 = vmul.f32 %v565, %v565
        %v582 = vmul.f32 %v566, %v566
        %v583 = vmul.f32 %v567, %v567
        %v584 = vsel %vm327, %v576, 0.0
        %585 = vadd.xlane.f32.xlu0 %v584
        %v586 = vpop.xlane.xlu0 %585
        %v587 = vsel %vm327, %v577, 0.0
        %588 = vadd.xlane.f32.xlu0 %v587
        %v589 = vpop.xlane.xlu0 %588
        %v590 = vsel %vm327, %v578, 0.0
        %591 = vadd.xlane.f32.xlu0 %v590
        %v592 = vpop.xlane.xlu0 %591
        %v593 = vsel %vm327, %v579, 0.0
        %594 = vadd.xlane.f32.xlu0 %v593
        %v595 = vpop.xlane.xlu0 %594
        %v596 = vsel %vm327, %v580, 0.0
        %597 = vadd.xlane.f32.xlu0 %v596
        %v598 = vpop.xlane.xlu0 %597
        %v599 = vsel %vm327, %v581, 0.0
        %600 = vadd.xlane.f32.xlu0 %v599
        %v601 = vpop.xlane.xlu0 %600
        %v602 = vsel %vm327, %v582, 0.0
        %603 = vadd.xlane.f32.xlu0 %v602
        %v604 = vpop.xlane.xlu0 %603
        %v605 = vsel %vm327, %v583, 0.0
        %606 = vadd.xlane.f32.xlu0 %v605
        %v607 = vpop.xlane.xlu0 %606
        %v608 = vmul.f32 %v586, 0.03125
        %v609 = vmul.f32 %v589, 0.03125
        %v610 = vmul.f32 %v592, 0.03125
        %v611 = vmul.f32 %v595, 0.03125
        %v612 = vmul.f32 %v598, 0.03125
        %v613 = vmul.f32 %v601, 0.03125
        %v614 = vmul.f32 %v604, 0.03125
        %v615 = vmul.f32 %v607, 0.03125
        %v616 = vmul.f32 %v568, %v568
        %v617 = vmul.f32 %v569, %v569
        %v618 = vmul.f32 %v570, %v570
        %v619 = vmul.f32 %v571, %v571
        %v620 = vmul.f32 %v572, %v572
        %v621 = vmul.f32 %v573, %v573
        %v622 = vmul.f32 %v574, %v574
        %v623 = vmul.f32 %v575, %v575
        %v624 = vsel %vm327, %v616, 0.0
        %625 = vadd.xlane.f32.xlu0 %v624
        %v626 = vpop.xlane.xlu0 %625
        %v627 = vsel %vm327, %v617, 0.0
        %628 = vadd.xlane.f32.xlu0 %v627
        %v629 = vpop.xlane.xlu0 %628
        %v630 = vsel %vm327, %v618, 0.0
        %631 = vadd.xlane.f32.xlu0 %v630
        %v632 = vpop.xlane.xlu0 %631
        %v633 = vsel %vm327, %v619, 0.0
        %634 = vadd.xlane.f32.xlu0 %v633
        %v635 = vpop.xlane.xlu0 %634
        %v636 = vsel %vm327, %v620, 0.0
        %637 = vadd.xlane.f32.xlu0 %v636
        %v638 = vpop.xlane.xlu0 %637
        %v639 = vsel %vm327, %v621, 0.0
        %640 = vadd.xlane.f32.xlu0 %v639
        %v641 = vpop.xlane.xlu0 %640
        %v642 = vsel %vm327, %v622, 0.0
        %643 = vadd.xlane.f32.xlu0 %v642
        %v644 = vpop.xlane.xlu0 %643
        %v645 = vsel %vm327, %v623, 0.0
        %646 = vadd.xlane.f32.xlu0 %v645
        %v647 = vpop.xlane.xlu0 %646
        %v648 = vmul.f32 %v626, 0.03125
        %v649 = vmul.f32 %v629, 0.03125
        %v650 = vmul.f32 %v632, 0.03125
        %v651 = vmul.f32 %v635, 0.03125
        %v652 = vmul.f32 %v638, 0.03125
        %v653 = vmul.f32 %v641, 0.03125
        %v654 = vmul.f32 %v644, 0.03125
        %v655 = vmul.f32 %v647, 0.03125
        %v656 = vsel %vm463, %v608, %v648
        %v657 = vsel %vm463, %v609, %v649
        %v658 = vsel %vm463, %v610, %v650
        %v659 = vsel %vm463, %v611, %v651
        %v660 = vsel %vm463, %v612, %v652
        %v661 = vsel %vm463, %v613, %v653
        %v662 = vsel %vm463, %v614, %v654
        %v663 = vsel %vm463, %v615, %v655
        %v664 = vadd.f32 %v656, 1e-05
        %v665 = vadd.f32 %v657, 1e-05
        %v666 = vadd.f32 %v658, 1e-05
        %v667 = vadd.f32 %v659, 1e-05
        %v668 = vadd.f32 %v660, 1e-05
        %v669 = vadd.f32 %v661, 1e-05
        %v670 = vadd.f32 %v662, 1e-05
        %v671 = vadd.f32 %v663, 1e-05
        %v672 = vrsqrt.pop %v664
        %v673 = vrsqrt.pop %v665
        %v674 = vrsqrt.pop %v666
        %v675 = vrsqrt.pop %v667
        %v676 = vrsqrt.pop %v668
        %v677 = vrsqrt.pop %v669
        %v678 = vrsqrt.pop %v670
        %v679 = vrsqrt.pop %v671
        %v680 = vmul.f32 %v552, %v672
        %v681 = vmul.f32 %v553, %v673
        %v682 = vmul.f32 %v554, %v674
        %v683 = vmul.f32 %v555, %v675
        %v684 = vmul.f32 %v556, %v676
        %v685 = vmul.f32 %v557, %v677
        %v686 = vmul.f32 %v558, %v678
        %v687 = vmul.f32 %v559, %v679
        %v688 = vlaneseq
        %v689 = vshrl.u32 %v688, 7
        %v690 = vsub.s32 0, %v689
        %v691 = vrot.slane %v460, %v690
        %v692 = vmul.f32 %v680, %v691
        %v693 = vmul.f32 %v681, %v691
        %v694 = vmul.f32 %v682, %v691
        %v695 = vmul.f32 %v683, %v691
        %v696 = vmul.f32 %v684, %v691
        %v697 = vmul.f32 %v685, %v691
        %v698 = vmul.f32 %v686, %v691
        %v699 = vmul.f32 %v687, %v691
        %v700 = vlaneseq
        %v701 = vshrl.u32 %v700, 7
        %v702 = vsub.s32 0, %v701
        %v703 = vrot.slane %v461, %v702
        %v704 = vadd.f32 %v692, %v703
        %v705 = vadd.f32 %v693, %v703
        %v706 = vadd.f32 %v694, %v703
        %v707 = vadd.f32 %v695, %v703
        %v708 = vadd.f32 %v696, %v703
        %v709 = vadd.f32 %v697, %v703
        %v710 = vadd.f32 %v698, %v703
        %v711 = vadd.f32 %v699, %v703
        %v712 = vmul.f32 %v704, 0.5
        %v713 = vmul.f32 %v705, 0.5
        %v714 = vmul.f32 %v706, 0.5
        %v715 = vmul.f32 %v707, 0.5
        %v716 = vmul.f32 %v708, 0.5
        %v717 = vmul.f32 %v709, 0.5
        %v718 = vmul.f32 %v710, 0.5
        %v719 = vmul.f32 %v711, 0.5
        %v720 = vmul.f32 %v704, 0.70710677
        %v721 = vmul.f32 %v705, 0.70710677
        %v722 = vmul.f32 %v706, 0.70710677
        %v723 = vmul.f32 %v707, 0.70710677
        %v724 = vmul.f32 %v708, 0.70710677
        %v725 = vmul.f32 %v709, 0.70710677
        %v726 = vmul.f32 %v710, 0.70710677
        %v727 = vmul.f32 %v711, 0.70710677
        %v728 = verf.f32.pop %v720
        %v729 = verf.f32.pop %v721
        %v730 = verf.f32.pop %v722
        %v731 = verf.f32.pop %v723
        %v732 = verf.f32.pop %v724
        %v733 = verf.f32.pop %v725
        %v734 = verf.f32.pop %v726
        %v735 = verf.f32.pop %v727
        %v736 = vadd.f32 %v728, 1.0
        %v737 = vadd.f32 %v729, 1.0
        %v738 = vadd.f32 %v730, 1.0
        %v739 = vadd.f32 %v731, 1.0
        %v740 = vadd.f32 %v732, 1.0
        %v741 = vadd.f32 %v733, 1.0
        %v742 = vadd.f32 %v734, 1.0
        %v743 = vadd.f32 %v735, 1.0
        %v744 = vmul.f32 %v712, %v736
        %v745 = vmul.f32 %v713, %v737
        %v746 = vmul.f32 %v714, %v738
        %v747 = vmul.f32 %v715, %v739
        %v748 = vmul.f32 %v716, %v740
        %v749 = vmul.f32 %v717, %v741
        %v750 = vmul.f32 %v718, %v742
        %v751 = vmul.f32 %v719, %v743
        %v752 = vsel %vm327, %v744, 0.0
        %v753 = vrot.slane %v752, 4
        %v754 = vadd.f32 %v752, %v753
        %v755 = vrot.slane %v754, 2
        %v756 = vadd.f32 %v754, %v755
        %v757 = vrot.slane %v756, 1
        %v758 = vadd.f32 %v756, %v757
        %v759 = vsel %vm327, %v745, 0.0
        %v760 = vrot.slane %v759, 4
        %v761 = vadd.f32 %v759, %v760
        %v762 = vrot.slane %v761, 2
        %v763 = vadd.f32 %v761, %v762
        %v764 = vrot.slane %v763, 1
        %v765 = vadd.f32 %v763, %v764
        %v766 = vsel %vm327, %v746, 0.0
        %v767 = vrot.slane %v766, 4
        %v768 = vadd.f32 %v766, %v767
        %v769 = vrot.slane %v768, 2
        %v770 = vadd.f32 %v768, %v769
        %v771 = vrot.slane %v770, 1
        %v772 = vadd.f32 %v770, %v771
        %v773 = vsel %vm327, %v747, 0.0
        %v774 = vrot.slane %v773, 4
        %v775 = vadd.f32 %v773, %v774
        %v776 = vrot.slane %v775, 2
        %v777 = vadd.f32 %v775, %v776
        %v778 = vrot.slane %v777, 1
        %v779 = vadd.f32 %v777, %v778
        %v780 = vsel %vm327, %v748, 0.0
        %v781 = vrot.slane %v780, 4
        %v782 = vadd.f32 %v780, %v781
        %v783 = vrot.slane %v782, 2
        %v784 = vadd.f32 %v782, %v783
        %v785 = vrot.slane %v784, 1
        %v786 = vadd.f32 %v784, %v785
        %v787 = vsel %vm327, %v749, 0.0
        %v788 = vrot.slane %v787, 4
        %v789 = vadd.f32 %v787, %v788
        %v790 = vrot.slane %v789, 2
        %v791 = vadd.f32 %v789, %v790
        %v792 = vrot.slane %v791, 1
        %v793 = vadd.f32 %v791, %v792
        %v794 = vsel %vm327, %v750, 0.0
        %v795 = vrot.slane %v794, 4
        %v796 = vadd.f32 %v794, %v795
        %v797 = vrot.slane %v796, 2
        %v798 = vadd.f32 %v796, %v797
        %v799 = vrot.slane %v798, 1
        %v800 = vadd.f32 %v798, %v799
        %v801 = vsel %vm327, %v751, 0.0
        %v802 = vrot.slane %v801, 4
        %v803 = vadd.f32 %v801, %v802
        %v804 = vrot.slane %v803, 2
        %v805 = vadd.f32 %v803, %v804
        %v806 = vrot.slane %v805, 1
        %v807 = vadd.f32 %v805, %v806
        %v808 = vmul.f32 %v758, 0.125
        %v809 = vmul.f32 %v765, 0.125
        %v810 = vmul.f32 %v772, 0.125
        %v811 = vmul.f32 %v779, 0.125
        %v812 = vmul.f32 %v786, 0.125
        %v813 = vmul.f32 %v793, 0.125
        %v814 = vmul.f32 %v800, 0.125
        %v815 = vmul.f32 %v807, 0.125
        %v816 = vld [vmem:[%s2] sm:$0xff]
        %v817 = vld [vmem:[%s2 + $0x8] sm:$0xff]
        %v818 = vld [vmem:[%s2 + $0x10] sm:$0xff]
        %v819 = vld [vmem:[%s2 + $0x18] sm:$0xff]
        %v820 = vld [vmem:[%s2 + $0x20] sm:$0xff]
        %v821 = vld [vmem:[%s2 + $0x28] sm:$0xff]
        %v822 = vld [vmem:[%s2 + $0x30] sm:$0xff]
        %v823 = vld [vmem:[%s2 + $0x38] sm:$0xff]
        %v824 = vld [vmem:[%s3 + $0x3] sm:$0x1]
        %v825 = vlaneseq
        %v826 = vshrl.u32 %v825, 7
        %v827 = vsub.s32 0, %v826
        %v828 = vrot.slane %v824, %v827
        %vm837 = vcmask 1041409
        %v838 = vsel %vm837, %v809, %v808
        %vm839 = vcmask 1042434
        %v840 = vsel %vm839, %v810, %v838
        %vm841 = vcmask 1043459
        %v842 = vsel %vm841, %v811, %v840
        %vm843 = vcmask 1044484
        %v844 = vsel %vm843, %v812, %v842
        %vm845 = vcmask 1045509
        %v846 = vsel %vm845, %v813, %v844
        %vm847 = vcmask 1046534
        %v848 = vsel %vm847, %v814, %v846
        %vm849 = vcmask 1047559
        %v850 = vsel %vm849, %v815, %v848
        %v851 = vsel %vm327, %v850, 0
        %853 = vmatprep.subr.mxu0 0.0
        %854 = vmatpush1.msra.mxu0 0.0
        %855 = vmatprep.subr.mxu0 0.0
        %856 = vmatpush1.msra.mxu0 0.0
        %857 = vmatprep.subr.mxu0 0.0
        %858 = vmatpush1.msra.mxu0 0.0
        %859 = vmatprep.subr.mxu0 0.0
        %860 = vmatpush1.msra.mxu0 0.0
        %861 = vmatprep.subr.mxu0 0.0
        %862 = vmatpush1.msra.mxu0 0.0
        %863 = vmatprep.subr.mxu0 0.0
        %864 = vmatpush1.msra.mxu0 0.0
        %865 = vmatprep.subr.mxu0 0.0
        %866 = vmatpush1.msra.mxu0 0.0
        %867 = vmatprep.subr.mxu0 0.0
        %868 = vmatpush1.msra.mxu0 0.0
        %869 = vmatprep.subr.mxu0 0.0
        %870 = vmatpush1.msra.mxu0 %v823
        %871 = vmatprep.subr.mxu0 0.0
        %872 = vmatpush1.msra.mxu0 %v822
        %873 = vmatprep.subr.mxu0 0.0
        %874 = vmatpush1.msra.mxu0 %v821
        %875 = vmatprep.subr.mxu0 0.0
        %876 = vmatpush1.msra.mxu0 %v820
        %877 = vmatprep.subr.mxu0 0.0
        %878 = vmatpush1.msra.mxu0 %v819
        %879 = vmatprep.subr.mxu0 0.0
        %880 = vmatpush1.msra.mxu0 %v818
        %881 = vmatprep.subr.mxu0 0.0
        %882 = vmatpush1.msra.mxu0 %v817
        %883 = vmatprep.subr.mxu0 0.0
        %884 = vmatpush1.msra.mxu0 %v816
        %885 = vmatprep.subr.mxu0 0.0
        %886 = vmatpush2.msra.mxu0 0.0
        %887 = vmatprep.subr.mxu0 0.0
        %888 = vmatpush2.msra.mxu0 0.0
        %889 = vmatprep.subr.mxu0 0.0
        %890 = vmatpush2.msra.mxu0 0.0
        %891 = vmatprep.subr.mxu0 0.0
        %892 = vmatpush2.msra.mxu0 0.0
        %893 = vmatprep.subr.mxu0 0.0
        %894 = vmatpush2.msra.mxu0 0.0
        %895 = vmatprep.subr.mxu0 0.0
        %896 = vmatpush2.msra.mxu0 0.0
        %897 = vmatprep.subr.mxu0 0.0
        %898 = vmatpush2.msra.mxu0 0.0
        %899 = vmatprep.subr.mxu0 0.0
        %900 = vmatpush2.msra.mxu0 0.0
        %901 = vmatprep.subr.mxu0 0.0
        %902 = vmatpush2.msra.mxu0 0.0
        %903 = vmatprep.subr.mxu0 0.0
        %904 = vmatpush2.msra.mxu0 0.0
        %905 = vmatprep.subr.mxu0 0.0
        %906 = vmatpush2.msra.mxu0 0.0
        %907 = vmatprep.subr.mxu0 0.0
        %908 = vmatpush2.msra.mxu0 0.0
        %909 = vmatprep.subr.mxu0 0.0
        %910 = vmatpush2.msra.mxu0 0.0
        %911 = vmatprep.subr.mxu0 0.0
        %912 = vmatpush2.msra.mxu0 0.0
        %913 = vmatprep.subr.mxu0 0.0
        %914 = vmatpush2.msra.mxu0 0.0
        %915 = vmatprep.subr.mxu0 0.0
        %916 = vmatpush2.msra.mxu0 0.0
        %917 = vmatprep.mubr.f32.mxu0 0.0
        %918 = vmatmul.mubr.f32.gmra.mxu0 %v851
        %v919 = vpop.f32.mrf.mxu0
        %v920 = vadd.f32 %v828, %v919
        %v921 = vpop.f32.mrf.mxu0
        %922 = vdwg.mxu0
        %v923 = vld [vmem:[%s4] sm:$0xff]
        %v924 = vld [vmem:[%s4 + $0x8] sm:$0xff]
        %v925 = vld [vmem:[%s4 + $0x10] sm:$0xff]
        %v926 = vld [vmem:[%s4 + $0x18] sm:$0xff]
        %v927 = vld [vmem:[%s4 + $0x20] sm:$0xff]
        %v928 = vld [vmem:[%s4 + $0x28] sm:$0xff]
        %v929 = vld [vmem:[%s4 + $0x30] sm:$0xff]
        %v930 = vld [vmem:[%s4 + $0x38] sm:$0xff]
        %v931 = vld [vmem:[%s5] sm:$0x1]
        %v932 = vlaneseq
        %v933 = vshrl.u32 %v932, 7
        %v934 = vsub.s32 0, %v933
        %v935 = vrot.slane %v931, %v934
        %v937 = vsel %vm327, %v920, 0
        %939 = vmatprep.subr.mxu0 0.0
        %940 = vmatpush1.msra.mxu0 0.0
        %941 = vmatprep.subr.mxu0 0.0
        %942 = vmatpush1.msra.mxu0 0.0
        %943 = vmatprep.subr.mxu0 0.0
        %944 = vmatpush1.msra.mxu0 0.0
        %945 = vmatprep.subr.mxu0 0.0
        %946 = vmatpush1.msra.mxu0 0.0
        %947 = vmatprep.subr.mxu0 0.0
        %948 = vmatpush1.msra.mxu0 0.0
        %949 = vmatprep.subr.mxu0 0.0
        %950 = vmatpush1.msra.mxu0 0.0
        %951 = vmatprep.subr.mxu0 0.0
        %952 = vmatpush1.msra.mxu0 0.0
        %953 = vmatprep.subr.mxu0 0.0
        %954 = vmatpush1.msra.mxu0 0.0
        %955 = vmatprep.subr.mxu0 0.0
        %956 = vmatpush1.msra.mxu0 %v930
        %957 = vmatprep.subr.mxu0 0.0
        %958 = vmatpush1.msra.mxu0 %v929
        %959 = vmatprep.subr.mxu0 0.0
        %960 = vmatpush1.msra.mxu0 %v928
        %961 = vmatprep.subr.mxu0 0.0
        %962 = vmatpush1.msra.mxu0 %v927
        %963 = vmatprep.subr.mxu0 0.0
        %964 = vmatpush1.msra.mxu0 %v926
        %965 = vmatprep.subr.mxu0 0.0
        %966 = vmatpush1.msra.mxu0 %v925
        %967 = vmatprep.subr.mxu0 0.0
        %968 = vmatpush1.msra.mxu0 %v924
        %969 = vmatprep.subr.mxu0 0.0
        %970 = vmatpush1.msra.mxu0 %v923
        %971 = vmatprep.subr.mxu0 0.0
        %972 = vmatpush2.msra.mxu0 0.0
        %973 = vmatprep.subr.mxu0 0.0
        %974 = vmatpush2.msra.mxu0 0.0
        %975 = vmatprep.subr.mxu0 0.0
        %976 = vmatpush2.msra.mxu0 0.0
        %977 = vmatprep.subr.mxu0 0.0
        %978 = vmatpush2.msra.mxu0 0.0
        %979 = vmatprep.subr.mxu0 0.0
        %980 = vmatpush2.msra.mxu0 0.0
        %981 = vmatprep.subr.mxu0 0.0
        %982 = vmatpush2.msra.mxu0 0.0
        %983 = vmatprep.subr.mxu0 0.0
        %984 = vmatpush2.msra.mxu0 0.0
        %985 = vmatprep.subr.mxu0 0.0
        %986 = vmatpush2.msra.mxu0 0.0
        %987 = vmatprep.subr.mxu0 0.0
        %988 = vmatpush2.msra.mxu0 0.0
        %989 = vmatprep.subr.mxu0 0.0
        %990 = vmatpush2.msra.mxu0 0.0
        %991 = vmatprep.subr.mxu0 0.0
        %992 = vmatpush2.msra.mxu0 0.0
        %993 = vmatprep.subr.mxu0 0.0
        %994 = vmatpush2.msra.mxu0 0.0
        %995 = vmatprep.subr.mxu0 0.0
        %996 = vmatpush2.msra.mxu0 0.0
        %997 = vmatprep.subr.mxu0 0.0
        %998 = vmatpush2.msra.mxu0 0.0
        %999 = vmatprep.subr.mxu0 0.0
        %1000 = vmatpush2.msra.mxu0 0.0
        %1001 = vmatprep.subr.mxu0 0.0
        %1002 = vmatpush2.msra.mxu0 0.0
        %1003 = vmatprep.mubr.f32.mxu0 0.0
        %1004 = vmatmul.mubr.f32.gmra.mxu0 %v937
        %v1005 = vpop.f32.mrf.mxu0
        %v1006 = vadd.f32 %v935, %v1005
        %v1007 = vpop.f32.mrf.mxu0
        %1008 = vdwg.mxu0
        %v1009 = vld [vmem:[%s5 + $0x1] sm:$0x1]
        %v1010 = vld [vmem:[%s5 + $0x2] sm:$0x1]
        %vm1011 = vcmask 261120
        %v1012 = vsel %vm1011, %v1006, 0.0
        %1013 = vadd.xlane.f32.xlu0 %v1012
        %v1014 = vpop.xlane.xlu0 %1013
        %v1015 = vrcp.pop 32.0
        %v1016 = vmul.f32 %v1014, %v1015
        %v1017 = vsub.f32 %v1006, %v1016
        %v1018 = vmul.f32 %v1017, %v1017
        %v1019 = vsel %vm1011, %v1018, 0.0
        %1020 = vadd.xlane.f32.xlu0 %v1019
        %v1021 = vpop.xlane.xlu0 %1020
        %v1022 = vmul.f32 %v1021, %v1015
        %v1023 = vadd.f32 %v1022, 1e-05
        %v1024 = vrsqrt.pop %v1023
        %v1025 = vmul.f32 %v1017, %v1024
        %v1026 = vlaneseq
        %v1027 = vshrl.u32 %v1026, 7
        %v1028 = vsub.s32 0, %v1027
        %v1029 = vrot.slane %v1009, %v1028
        %v1030 = vmul.f32 %v1025, %v1029
        %v1031 = vlaneseq
        %v1032 = vshrl.u32 %v1031, 7
        %v1033 = vsub.s32 0, %v1032
        %v1034 = vrot.slane %v1010, %v1033
        %v1035 = vadd.f32 %v1030, %v1034
        %v1036 = vmul.f32 %v1035, 0.5
        %v1037 = vmul.f32 %v1035, 0.70710677
        %v1038 = verf.f32.pop %v1037
        %v1039 = vadd.f32 %v1038, 1.0
        %v1040 = vmul.f32 %v1036, %v1039
        %v1041 = vld [vmem:[%s6] sm:$0xff]
        %v1042 = vld [vmem:[%s6 + $0x8] sm:$0xff]
        %v1043 = vld [vmem:[%s6 + $0x10] sm:$0xff]
        %v1044 = vld [vmem:[%s6 + $0x18] sm:$0xff]
        %v1045 = vld [vmem:[%s7] sm:$0x1]
        %v1047 = vlaneseq
        %v1048 = vshrl.u32 %v1047, 7
        %v1049 = vsub.s32 0, %v1048
        %v1050 = vrot.slane %v1045, %v1049
        %v1053 = vsel %vm1011, %v1040, 0
        %1055 = vmatprep.subr.mxu0 0.0
        %1056 = vmatpush1.msra.mxu0 0.0
        %1057 = vmatprep.subr.mxu0 0.0
        %1058 = vmatpush1.msra.mxu0 0.0
        %1059 = vmatprep.subr.mxu0 0.0
        %1060 = vmatpush1.msra.mxu0 0.0
        %1061 = vmatprep.subr.mxu0 0.0
        %1062 = vmatpush1.msra.mxu0 0.0
        %1063 = vmatprep.subr.mxu0 0.0
        %1064 = vmatpush1.msra.mxu0 0.0
        %1065 = vmatprep.subr.mxu0 0.0
        %1066 = vmatpush1.msra.mxu0 0.0
        %1067 = vmatprep.subr.mxu0 0.0
        %1068 = vmatpush1.msra.mxu0 0.0
        %1069 = vmatprep.subr.mxu0 0.0
        %1070 = vmatpush1.msra.mxu0 0.0
        %1071 = vmatprep.subr.mxu0 0.0
        %1072 = vmatpush1.msra.mxu0 0.0
        %1073 = vmatprep.subr.mxu0 0.0
        %1074 = vmatpush1.msra.mxu0 0.0
        %1075 = vmatprep.subr.mxu0 0.0
        %1076 = vmatpush1.msra.mxu0 0.0
        %1077 = vmatprep.subr.mxu0 0.0
        %1078 = vmatpush1.msra.mxu0 0.0
        %1079 = vmatprep.subr.mxu0 0.0
        %1080 = vmatpush1.msra.mxu0 %v1044
        %1081 = vmatprep.subr.mxu0 0.0
        %1082 = vmatpush1.msra.mxu0 %v1043
        %1083 = vmatprep.subr.mxu0 0.0
        %1084 = vmatpush1.msra.mxu0 %v1042
        %1085 = vmatprep.subr.mxu0 0.0
        %1086 = vmatpush1.msra.mxu0 %v1041
        %1087 = vmatprep.subr.mxu0 0.0
        %1088 = vmatpush2.msra.mxu0 0.0
        %1089 = vmatprep.subr.mxu0 0.0
        %1090 = vmatpush2.msra.mxu0 0.0
        %1091 = vmatprep.subr.mxu0 0.0
        %1092 = vmatpush2.msra.mxu0 0.0
        %1093 = vmatprep.subr.mxu0 0.0
        %1094 = vmatpush2.msra.mxu0 0.0
        %1095 = vmatprep.subr.mxu0 0.0
        %1096 = vmatpush2.msra.mxu0 0.0
        %1097 = vmatprep.subr.mxu0 0.0
        %1098 = vmatpush2.msra.mxu0 0.0
        %1099 = vmatprep.subr.mxu0 0.0
        %1100 = vmatpush2.msra.mxu0 0.0
        %1101 = vmatprep.subr.mxu0 0.0
        %1102 = vmatpush2.msra.mxu0 0.0
        %1103 = vmatprep.subr.mxu0 0.0
        %1104 = vmatpush2.msra.mxu0 0.0
        %1105 = vmatprep.subr.mxu0 0.0
        %1106 = vmatpush2.msra.mxu0 0.0
        %1107 = vmatprep.subr.mxu0 0.0
        %1108 = vmatpush2.msra.mxu0 0.0
        %1109 = vmatprep.subr.mxu0 0.0
        %1110 = vmatpush2.msra.mxu0 0.0
        %1111 = vmatprep.subr.mxu0 0.0
        %1112 = vmatpush2.msra.mxu0 0.0
        %1113 = vmatprep.subr.mxu0 0.0
        %1114 = vmatpush2.msra.mxu0 0.0
        %1115 = vmatprep.subr.mxu0 0.0
        %1116 = vmatpush2.msra.mxu0 0.0
        %1117 = vmatprep.subr.mxu0 0.0
        %1118 = vmatpush2.msra.mxu0 0.0
        %1119 = vmatprep.mubr.f32.mxu0 0.0
        %1120 = vmatmul.mubr.f32.gmra.mxu0 %v1053
        %v1121 = vpop.f32.mrf.mxu0
        %v1122 = vadd.f32 %v1050, %v1121
        %v1123 = vpop.f32.mrf.mxu0
        %1124 = vdwg.mxu0
        %1125 = vst [vmem:[%s299] sm:$0xff] %v1122
        %s1126 = sand.u32 %s203, 1
        %s1127 = scalar_lea.sflag [#allocation3], %s1126
        %s1128 = sand.u32 %s203, 1
        %s1129 = smul.addr %s1128, 8
        %s1130 = scalar_lea.vmem [#allocation2], %s1129
        // Predicated region
        $region53: #{tpu_custom_call.1} parent=51 // pred_check
          %p1131 = pneg %p213
        $region54: #{tpu_custom_call.1} parent=51 // pred_check_branch
          %1133 = sbr.rel (%p1131) target = $region56
        $region55: #{tpu_custom_call.1} parent=51 // pred_region
          %s1135 = ssub.s32 128, 128
          %1136 = vsyncadd %s1127, %s1135
          %s1137 = smul.addr %s22, 128
          %s1138 = scalar_lea.hbm %s8, %s1137
          %s1140 = sshll.u32 %s1130, 4
          %s1141 = int_to_ptr.vmem [resolvable:$true] %s1140
          %1143 = dma.vmem_to_hbm [thread:$0]  %s1141, 128, %s1138, %s1127
        $region56: #{tpu_custom_call.1} parent=51 // pred_fallthru
          _
      $region52: #{tpu_custom_call.1} parent=5 // pred_fallthru
        _
      %p1144 = scmp.le.s32.totalorder 2, %s17
      // Predicated region
      $region57: #{tpu_custom_call.1} parent=5 // pred_check
        %p1145 = pneg %p1144
      $region58: #{tpu_custom_call.1} parent=5 // pred_check_branch
        %1147 = sbr.rel (%p1145) target = $region60
      $region59: #{tpu_custom_call.1} parent=5 // pred_region
        %s1148 = ssub.s32 %s17, 2
        // Predicated region
        $region61: #{tpu_custom_call.1} parent=59 // pred_check
          %p1149 = pneg %p219
        $region62: #{tpu_custom_call.1} parent=59 // pred_check_branch
          %1151 = sbr.rel (%p1149) target = $region64
        $region63: #{tpu_custom_call.1} parent=59 // pred_region
          %s1152 = sand.u32 %s204, 1
          %s1153 = scalar_lea.sflag [#allocation3], %s1152
          %s1154 = sand.u32 %s204, 1
          %s1155 = smul.addr %s1154, 8
          %s1156 = scalar_lea.vmem [#allocation2], %s1155
          %1157 = dma.done %s1153, 128
        $region64: #{tpu_custom_call.1} parent=59 // pred_fallthru
          _
      $region60: #{tpu_custom_call.1} parent=5 // pred_fallthru
        _
    $region6: #{tpu_custom_call.1} parent=1 // loop_footer
      %s21 = sadd.s32 1, %s17
    $region7: #{tpu_custom_call.1} parent=1 // loop_footer_branch
      %16 = sbr.rel target = $region3
    $region8: #{tpu_custom_call.1} parent=1 // loop_exit
      _
    %1158 = vsyncpa [#allocation3], 1
    %s1159 = scalar_lea.sflag [#allocation3], 1
    %1160 = vsyncpa %s1159, 1

</llo_original>
